<compile_context>
chip_gen: v7x
topology: tpu7x:2x2x1
jax: 0.10.0
libtpu: 0.0.40
codegen_flags: <defaults>
</compile_context>

<pallas_src>
import functools

import numpy as np
import jax
import jax.numpy as jnp
from jax.experimental import pallas as pl
from jax.experimental.pallas import tpu as pltpu


def _round_up(x, m):
    return -(-x // m) * m


def _cat_embed_kernel(v_sizes, v_offsets, ids_ref, wbd_ref, out_ref):
    """One batch tile: multi-hot build (VPU) + one MXU matmul + one dense store.

    ids_ref : VMEM int32 [TB, F]                  lookup ids for this tile
    wbd_ref : VMEM f32   [sum_f Vpad_f, d_total]  block-diagonal packed tables
    out_ref : VMEM f32   [TB, d_total]
    """
    tb = out_ref.shape[0]
    v_total = wbd_ref.shape[0]
    ids = ids_ref[...]                                          # [TB, F]
    col = jax.lax.broadcasted_iota(jnp.int32, (tb, v_total), 1)

    hot = None
    for f, (vsz, voff) in enumerate(zip(v_sizes, v_offsets)):
        # Clamp (an out-of-range id must not become a silent OOB read) and
        # shift into this feature's row range of the block-diagonal table.
        idf = jnp.clip(ids[:, f:f + 1], 0, vsz - 1) + voff      # [TB, 1]
        eq = col == idf                                         # [TB, v_total]
        hot = eq if hot is None else jnp.logical_or(hot, eq)

    multi_hot = hot.astype(jnp.float32)
    out_ref[...] = jnp.dot(
        multi_hot, wbd_ref[...], preferred_element_type=jnp.float32
    ).astype(out_ref.dtype)


@functools.partial(jax.jit, static_argnames=("tile_b", "out_dtype"))
def _fused_cat_embed(ids, tables, tile_b=2048, out_dtype=jnp.float32):
    """ids: int32 [B, F]; tables: tuple of f32 [V_f, D_f] -> [B, sum_f D_f]."""
    batch, n_feat = ids.shape
    assert n_feat == len(tables) and n_feat >= 1

    v_sizes = tuple(int(t.shape[0]) for t in tables)
    dims = tuple(int(t.shape[1]) for t in tables)
    d_total = int(sum(dims))
    d_offsets = tuple(int(o) for o in np.cumsum((0,) + dims)[:-1])
    # Each vocab padded to a multiple of 128 so every feature's one-hot block
    # starts on a lane boundary of the matmul K dimension.
    v_pads = tuple(_round_up(v, 128) for v in v_sizes)
    v_offsets = tuple(int(o) for o in np.cumsum((0,) + v_pads)[:-1])
    v_total = int(sum(v_pads))

    # Pack all tables into one block-diagonal [v_total, d_total] matrix.
    wbd = jnp.zeros((v_total, d_total), jnp.float32)
    for t, voff, doff in zip(tables, v_offsets, d_offsets):
        wbd = jax.lax.dynamic_update_slice(wbd, t.astype(jnp.float32), (voff, doff))

    # Batch tile: as large as tile_b (amortize per-step overhead), multiple of
    # 8, and — when the batch is big enough — at least 2 grid steps so the
    # "parallel" axis can be sharded across both v7x TensorCores.
    b8 = _round_up(batch, 8)
    tb = min(tile_b, b8)
    if b8 >= 16:
        tb = min(tb, _round_up(-(-b8 // 2), 8))
    tb = _round_up(tb, 8)
    b_pad = _round_up(batch, tb)

    ids = ids.astype(jnp.int32)
    if b_pad != batch:
        ids = jnp.pad(ids, ((0, b_pad - batch), (0, 0)))   # pad rows use id 0

    kernel = functools.partial(_cat_embed_kernel, v_sizes, v_offsets)

    out = pl.pallas_call(
        kernel,
        out_shape=jax.ShapeDtypeStruct((b_pad, d_total), out_dtype),
        grid=(b_pad // tb,),
        in_specs=[
            pl.BlockSpec((tb, n_feat), lambda i: (i, 0)),         # ids tile
            pl.BlockSpec((v_total, d_total), lambda i: (0, 0)),   # resident tables
        ],
        out_specs=pl.BlockSpec((tb, d_total), lambda i: (i, 0)),
        compiler_params=pltpu.CompilerParams(
            dimension_semantics=("parallel",),     # megacore-shardable batch axis
            vmem_limit_bytes=32 * 1024 * 1024,     # safe on v5e/v6e/v7x
        ),
    )(ids, wbd)

    return out[:batch] if b_pad != batch else out


class CatEmbed:
    """JAX/Pallas port of the PyTorch CatEmbed module (forward only)."""

    def __init__(self, params, key):
        self.tables = {}
        for fe_name, cfg in params["cat_embed_sizes"].items():
            key, sub = jax.random.split(key)
            # nn.Embedding default init: weight ~ N(0, 1)
            self.tables[fe_name] = jax.random.normal(
                sub,
                (cfg["num_categories"], cfg["embedding_dim"]),
                dtype=jnp.float32,
            )

    def __call__(self, x_cat):
        names = list(x_cat.keys())   # same iteration order as the PyTorch forward
        ids = jnp.stack([x_cat[n].astype(jnp.int32) for n in names], axis=1)  # [B, F]
        tables = tuple(self.tables[n] for n in names)
        return _fused_cat_embed(ids, tables)


if __name__ == "__main__":
    params = {
        "cat_embed_sizes": {
            "cat_a": {"num_categories": 7, "embedding_dim": 4},
            "cat_b": {"num_categories": 5, "embedding_dim": 8},
            "cat_c": {"num_categories": 11, "embedding_dim": 16},
        }
    }

    key = jax.random.PRNGKey(0)
    key, k_mod, k_a, k_b, k_c = jax.random.split(key, 5)

    model = CatEmbed(params, k_mod)

    # B=24 exercises batch padding and a 2-step grid (tb=16, b_pad=32).
    B = 24
    x_cat = {
        "cat_a": jax.random.randint(k_a, (B,), 0, 7, dtype=jnp.int32),
        "cat_b": jax.random.randint(k_b, (B,), 0, 5, dtype=jnp.int32),
        "cat_c": jax.random.randint(k_c, (B,), 0, 11, dtype=jnp.int32),
    }

    out = jax.block_until_ready(model(x_cat))

    # Reference: plain-JAX embedding lookup + concat.
    ref = jnp.concatenate(
        [model.tables[name][x_cat[name]] for name in x_cat], axis=1
    )
    assert out.shape == (B, 4 + 8 + 16), out.shape
    assert jnp.allclose(out, ref, atol=1e-5, rtol=1e-5), "mismatch vs reference"

    print("KERNEL_OK")
</pallas_src>

<mosaic_0001>
module attributes {stable_mosaic.version = 11 : i64} {
  func.func @_cat_embed_kernel(%arg0: i32, %arg1: memref<16x3xi32, #tpu.memory_space<vmem>>, %arg2: memref<384x28xf32, #tpu.memory_space<vmem>>, %arg3: memref<16x28xf32, #tpu.memory_space<vmem>>) attributes {dimension_semantics = [#tpu.dimension_semantics<parallel>], iteration_bounds = array<i64: 2>, scalar_prefetch = 0 : i64, scratch_operands = 0 : i64, tpu.core_type = #tpu.core_type<tc>, window_params = [{transform_indices = @transform_0, window_bounds = array<i64: 16, 3>}, {pipeline_mode = #tpu.pipeline_mode<synchronous>, transform_indices = @transform_1, window_bounds = array<i64: 384, 28>}, {transform_indices = @transform_2, window_bounds = array<i64: 16, 28>}]} {
    %c0 = arith.constant 0 : index
    %c0_0 = arith.constant 0 : index
    %0 = vector.load %arg1[%c0, %c0_0] : memref<16x3xi32, #tpu.memory_space<vmem>>, vector<16x3xi32>
    %1 = tpu.iota {dimensions = array<i32: 1>} : vector<16x384xi32>
    %2 = vector.extract_strided_slice %0 {offsets = [0, 0], sizes = [16, 1], strides = [1, 1]} : vector<16x3xi32> to vector<16x1xi32>
    %c0_i32 = arith.constant 0 : i32
    %c6_i32 = arith.constant 6 : i32
    %3 = vector.broadcast %c0_i32 : i32 to vector<16x1xi32>
    %4 = arith.maxsi %3, %2 : vector<16x1xi32>
    %5 = vector.broadcast %c6_i32 : i32 to vector<16x1xi32>
    %6 = arith.minsi %5, %4 : vector<16x1xi32>
    %c0_i32_1 = arith.constant 0 : i32
    %7 = vector.broadcast %c0_i32_1 : i32 to vector<16x1xi32>
    %8 = arith.addi %6, %7 : vector<16x1xi32>
    %9 = vector.broadcast %8 : vector<16x1xi32> to vector<16x384xi32>
    %10 = arith.cmpi eq, %1, %9 : vector<16x384xi32>
    %11 = vector.extract_strided_slice %0 {offsets = [0, 1], sizes = [16, 1], strides = [1, 1]} : vector<16x3xi32> to vector<16x1xi32>
    %c0_i32_2 = arith.constant 0 : i32
    %c4_i32 = arith.constant 4 : i32
    %12 = vector.broadcast %c0_i32_2 : i32 to vector<16x1xi32>
    %13 = arith.maxsi %12, %11 : vector<16x1xi32>
    %14 = vector.broadcast %c4_i32 : i32 to vector<16x1xi32>
    %15 = arith.minsi %14, %13 : vector<16x1xi32>
    %c128_i32 = arith.constant 128 : i32
    %16 = vector.broadcast %c128_i32 : i32 to vector<16x1xi32>
    %17 = arith.addi %15, %16 : vector<16x1xi32>
    %18 = vector.broadcast %17 : vector<16x1xi32> to vector<16x384xi32>
    %19 = arith.cmpi eq, %1, %18 : vector<16x384xi32>
    %20 = arith.ori %10, %19 : vector<16x384xi1>
    %21 = vector.extract_strided_slice %0 {offsets = [0, 2], sizes = [16, 1], strides = [1, 1]} : vector<16x3xi32> to vector<16x1xi32>
    %c0_i32_3 = arith.constant 0 : i32
    %c10_i32 = arith.constant 10 : i32
    %22 = vector.broadcast %c0_i32_3 : i32 to vector<16x1xi32>
    %23 = arith.maxsi %22, %21 : vector<16x1xi32>
    %24 = vector.broadcast %c10_i32 : i32 to vector<16x1xi32>
    %25 = arith.minsi %24, %23 : vector<16x1xi32>
    %c256_i32 = arith.constant 256 : i32
    %26 = vector.broadcast %c256_i32 : i32 to vector<16x1xi32>
    %27 = arith.addi %25, %26 : vector<16x1xi32>
    %28 = vector.broadcast %27 : vector<16x1xi32> to vector<16x384xi32>
    %29 = arith.cmpi eq, %1, %28 : vector<16x384xi32>
    %30 = arith.ori %20, %29 : vector<16x384xi1>
    %31 = arith.extui %30 : vector<16x384xi1> to vector<16x384xi32>
    %32 = arith.sitofp %31 : vector<16x384xi32> to vector<16x384xf32>
    %c0_4 = arith.constant 0 : index
    %c0_5 = arith.constant 0 : index
    %33 = vector.load %arg2[%c0_4, %c0_5] : memref<384x28xf32, #tpu.memory_space<vmem>>, vector<384x28xf32>
    %cst = arith.constant dense<0.000000e+00> : vector<16x28xf32>
    %34 = tpu.matmul %32, %33, %cst {dimension_numbers = #tpu.dot_dimension_numbers<[1], [0], [0], [1], [0, 0, 1, 1], [], []>} : vector<16x384xf32>, vector<384x28xf32>, vector<16x28xf32> -> vector<16x28xf32>
    %c0_6 = arith.constant 0 : index
    %c0_7 = arith.constant 0 : index
    %35 = vector.load %arg3[%c0_6, %c0_7] : memref<16x28xf32, #tpu.memory_space<vmem>>, vector<16x28xf32>
    tpu.vector_store %arg3[%c0_6, %c0_7], %34 {strides = array<i32>} : memref<16x28xf32, #tpu.memory_space<vmem>>, vector<16x28xf32>,
    return
  }
  func.func @transform_0(%arg0: i32) -> (i32, i32) {
    %c0_i32 = arith.constant 0 : i32
    %c0_i32_0 = arith.constant 0 : i32
    return %arg0, %c0_i32 : i32, i32
  }
  func.func @transform_1(%arg0: i32) -> (i32, i32) {
    %c0_i32 = arith.constant 0 : i32
    %c0_i32_0 = arith.constant 0 : i32
    %c0_i32_1 = arith.constant 0 : i32
    return %c0_i32, %c0_i32_0 : i32, i32
  }
  func.func @transform_2(%arg0: i32) -> (i32, i32) {
    %c0_i32 = arith.constant 0 : i32
    %c0_i32_0 = arith.constant 0 : i32
    return %arg0, %c0_i32 : i32, i32
  }
}

</mosaic_0001>

<llo_original>
// kernel: _fused_cat_embed.1
$region0: #{_fused_cat_embed.1}
  #allocation0 [shape = 'u32[]', space=smem, size = 0x4, offset = 0x4, fixed_abs, tag = 'smem constant byte address 0x4 - core index']
  #allocation1 [shape = 'u32[144,128]{1,0:T(1,128)}', space=vmem, size = 0x12000, scoped, tag = 'internal scratch']
  %s0 = inlined_call_operand.vmem [shape: s32[32,3], index: 0, kind: input, shape index: {}]
  %s1 = inlined_call_operand.vmem [shape: f32[384,28], index: 1, kind: input, shape index: {}]
  %s2 = inlined_call_operand.vmem [shape: f32[32,28], index: 2, kind: output, shape index: {}]
  %s3 = sld [smem:[#allocation0]]
  $region41: #{_fused_cat_embed.1} parent=0
    _
  %s5 = ssub.s32 1, %s3
  %s6 = scalar_select 0, %s5, %s3
  loop: start=0, step=1, limit=4
  $region2: #{_fused_cat_embed.1} parent=0 // loop_pre_header
    _
  $region3: #{_fused_cat_embed.1} parent=0 // loop_header
    %s8 = sphi 0, %s12
    %p9 = scmp.ge.s32.totalorder %s8, 4
    %s18 = sphi 0, %s20
    %s21 = sphi 0, %s18
    %s22 = sphi 0, %s21
    %s38 = sphi 0, %s22
    %s42 = sphi 0, %s42
    %s44 = sphi 0, %s42
    %s45 = sphi 0, %s44
    %s59 = sphi 0, %s45
    %s65 = sphi 0, %s67
    %s68 = sphi 0, %s65
    %s69 = sphi 0, %s68
    %s85 = sphi 0, %s69
  $region4: #{_fused_cat_embed.1} parent=0 // loop_header_branch
    %11 = sbr.rel (%p9) target = $region8
  $region5: #{_fused_cat_embed.1} parent=0 // loop_body
    %s13 = ssub.s32 %s8, 1
    %s14 = ssub.s32 %s8, 2
    %s15 = sadd.s32 %s8, 1
    %s16 = ssub.s32 %s8, %s15
    %p17 = scmp.eq.s32.totalorder %s16, 0
    %s19 = sadd.s32 %s18, 1
    %s20 = scalar_select %p17, %s18, %s19
    %p23 = pneg %p17
    %p24 = scmp.eq.s32.totalorder %s8, 1
    %p25 = por %p23, %p24
    %p26 = scmp.ne.s32.totalorder %s18, %s21
    %p27 = scmp.eq.s32.totalorder %s8, 0
    %p28 = por %p26, %p27
    %p29 = scmp.ne.s32.totalorder %s18, %s21
    %p30 = scmp.eq.s32.totalorder %s13, 1
    %p31 = por %p29, %p30
    %p32 = scmp.ne.s32.totalorder %s21, %s22
    %p33 = scmp.eq.s32.totalorder %s13, 0
    %p34 = por %p32, %p33
    %p35 = scmp.ne.s32.totalorder %s21, %s22
    %p36 = scmp.eq.s32.totalorder %s14, 1
    %p37 = por %p35, %p36
    %p39 = scmp.ne.s32.totalorder %s22, %s38
    %p40 = scmp.eq.s32.totalorder %s14, 0
    %p41 = por %p39, %p40
    %s43 = sadd.s32 %s42, 1
    %p46 = scmp.eq.s32.totalorder %s8, 1
    %p47 = scmp.ne.s32.totalorder %s42, %s44
    %p48 = scmp.eq.s32.totalorder %s8, 0
    %p49 = por %p47, %p48
    %p50 = scmp.ne.s32.totalorder %s42, %s44
    %p51 = scmp.eq.s32.totalorder %s13, 1
    %p52 = por %p50, %p51
    %p53 = scmp.ne.s32.totalorder %s44, %s45
    %p54 = scmp.eq.s32.totalorder %s13, 0
    %p55 = por %p53, %p54
    %p56 = scmp.ne.s32.totalorder %s44, %s45
    %p57 = scmp.eq.s32.totalorder %s14, 1
    %p58 = por %p56, %p57
    %p60 = scmp.ne.s32.totalorder %s45, %s59
    %p61 = scmp.eq.s32.totalorder %s14, 0
    %p62 = por %p60, %p61
    %s63 = ssub.s32 %s8, %s15
    %p64 = scmp.eq.s32.totalorder %s63, 0
    %s66 = sadd.s32 %s65, 1
    %s67 = scalar_select %p64, %s65, %s66
    %p70 = pneg %p64
    %p71 = scmp.eq.s32.totalorder %s8, 1
    %p72 = por %p70, %p71
    %p73 = scmp.ne.s32.totalorder %s65, %s68
    %p74 = scmp.eq.s32.totalorder %s8, 0
    %p75 = por %p73, %p74
    %p76 = scmp.ne.s32.totalorder %s65, %s68
    %p77 = scmp.eq.s32.totalorder %s13, 1
    %p78 = por %p76, %p77
    %p79 = scmp.ne.s32.totalorder %s68, %s69
    %p80 = scmp.eq.s32.totalorder %s13, 0
    %p81 = por %p79, %p80
    %p82 = scmp.ne.s32.totalorder %s68, %s69
    %p83 = scmp.eq.s32.totalorder %s14, 1
    %p84 = por %p82, %p83
    %p86 = scmp.ne.s32.totalorder %s69, %s85
    %p87 = scmp.eq.s32.totalorder %s14, 0
    %p88 = por %p86, %p87
    %p89 = scmp.le.s32.totalorder 1, %s8
    %p90 = scmp.lt.s32.totalorder %s8, 3
    %p91 = pnand %p89, %p90
    %p92 = pneg %p91
    // Predicated region
    $region9: #{_fused_cat_embed.1} parent=5 // pred_check
      _
    $region10: #{_fused_cat_embed.1} parent=5 // pred_check_branch
      %94 = sbr.rel (%p91) target = $region12
    $region11: #{_fused_cat_embed.1} parent=5 // pred_region
      %s95 = ssub.s32 %s8, 1
      // Predicated region
      $region13: #{_fused_cat_embed.1} parent=11 // pred_check
        %p96 = pneg %p55
      $region14: #{_fused_cat_embed.1} parent=11 // pred_check_branch
        %98 = sbr.rel (%p96) target = $region16
      $region15: #{_fused_cat_embed.1} parent=11 // pred_region
        _
      $region16: #{_fused_cat_embed.1} parent=11 // pred_fallthru
        _
    $region12: #{_fused_cat_embed.1} parent=5 // pred_fallthru
      _
    %p99 = scmp.lt.s32.totalorder %s8, 2
    // Predicated region
    $region17: #{_fused_cat_embed.1} parent=5 // pred_check
      %p100 = pneg %p99
    $region18: #{_fused_cat_embed.1} parent=5 // pred_check_branch
      %102 = sbr.rel (%p100) target = $region20
    $region19: #{_fused_cat_embed.1} parent=5 // pred_region
      // Predicated region
      $region21: #{_fused_cat_embed.1} parent=19 // pred_check
        %p103 = pneg %p28
      $region22: #{_fused_cat_embed.1} parent=19 // pred_check_branch
        %105 = sbr.rel (%p103) target = $region24
      $region23: #{_fused_cat_embed.1} parent=19 // pred_region
        %s106 = smul.u32 2, %s8
        %p107 = scmp.lt.s32.totalorder %s106, 3
        %s108 = scalar_select %p107, %s106, 3
        %s109 = smul.addr %s108, 8
        %s110 = scalar_lea.vmem %s0, %s109
        %s111 = smul.u32 2, %s8
      $region24: #{_fused_cat_embed.1} parent=19 // pred_fallthru
        _
    $region20: #{_fused_cat_embed.1} parent=5 // pred_fallthru
      _
    %p112 = scmp.le.s32.totalorder 1, %s8
    %p113 = scmp.lt.s32.totalorder %s8, 3
    %p114 = pnand %p112, %p113
    %p115 = pneg %p114
    // Predicated region
    $region25: #{_fused_cat_embed.1} parent=5 // pred_check
      _
    $region26: #{_fused_cat_embed.1} parent=5 // pred_check_branch
      %117 = sbr.rel (%p114) target = $region28
    $region27: #{_fused_cat_embed.1} parent=5 // pred_region
      %s118 = ssub.s32 %s8, 1
      %s119 = smul.u32 2, %s13
      %p120 = scmp.lt.s32.totalorder %s119, 3
      %s121 = scalar_select %p120, %s119, 3
      %s122 = smul.addr %s121, 8
      %s123 = scalar_lea.vmem %s0, %s122
      %p124 = pneg %p34
      %p125 = pneg %p31
      %p126 = pneg %p55
      %p127 = pneg %p52
      %p128 = pneg %p81
      %p129 = pneg %p78
      %s130 = smul.u32 2, %s13
      %p131 = scmp.lt.s32.totalorder %s130, 3
      %s132 = scalar_select %p131, %s130, 3
      %s133 = smul.addr %s132, 8
      %s134 = scalar_lea.vmem %s2, %s133
      %s135 = smul.u32 2, %s13
      %p136 = scmp.lt.s32.totalorder %s135, 3
      %s137 = scalar_select %p136, %s135, 3
      %s138 = smul.addr %s137, 8
      %s139 = scalar_lea.vmem %s0, %s138
      %s140 = smul.u32 2, %s13
      %s141 = smul.u32 2, %s13
      %p142 = scmp.lt.s32.totalorder %s141, 3
      %s143 = scalar_select %p142, %s141, 3
      %s144 = smul.addr %s143, 8
      %s145 = scalar_lea.vmem %s2, %s144
      %s146 = smul.u32 2, %s13
      %v147 = vld [vmem:[%s139] sm:$0xff]
      %v148 = vld [vmem:[%s139 + $0x8] sm:$0xff]
      %v149 = vlaneseq
      %v150 = vand.u32 %v149, 127
      %v151 = vadd.s32 %v150, 128
      %v152 = vadd.s32 %v150, 256
      %vm153 = vcmp.gt.s32.totalorder %v147, 0
      %v154 = vsel %vm153, %v147, 0
      %vm155 = vcmp.gt.s32.totalorder %v148, 0
      %v156 = vsel %vm155, %v148, 0
      %vm157 = vcmp.lt.s32.totalorder %v154, 6
      %v158 = vsel %vm157, %v154, 6
      %vm159 = vcmp.lt.s32.totalorder %v156, 6
      %v160 = vsel %vm159, %v156, 6
      %161 = vset.pattern.permute.xlu0 0
      %162 = vperm.xlu0 %161, %v158
      %v163 = vpop.permute.xlu0 %162
      %164 = vset.pattern.permute.xlu0 0
      %165 = vperm.xlu0 %164, %v160
      %v166 = vpop.permute.xlu0 %165
      %vm167 = vcmp.eq.s32.totalorder %v150, %v163
      %vm168 = vcmp.eq.s32.totalorder %v151, %v163
      %vm169 = vcmp.eq.s32.totalorder %v152, %v163
      %vm170 = vcmp.eq.s32.totalorder %v150, %v166
      %vm171 = vcmp.eq.s32.totalorder %v151, %v166
      %vm172 = vcmp.eq.s32.totalorder %v152, %v166
      %vm173 = vcmp.lt.s32.totalorder %v154, 4
      %v174 = vsel %vm173, %v154, 4
      %vm175 = vcmp.lt.s32.totalorder %v156, 4
      %v176 = vsel %vm175, %v156, 4
      %v177 = vadd.s32 %v174, 128
      %v178 = vadd.s32 %v176, 128
      %179 = vset.pattern.permute.xlu0 1
      %180 = vperm.xlu0 %179, %v177
      %v181 = vpop.permute.xlu0 %180
      %182 = vset.pattern.permute.xlu0 1
      %183 = vperm.xlu0 %182, %v178
      %v184 = vpop.permute.xlu0 %183
      %vm185 = vcmp.eq.s32.totalorder %v150, %v181
      %vm186 = vcmp.eq.s32.totalorder %v151, %v181
      %vm187 = vcmp.eq.s32.totalorder %v152, %v181
      %vm188 = vcmp.eq.s32.totalorder %v150, %v184
      %vm189 = vcmp.eq.s32.totalorder %v151, %v184
      %vm190 = vcmp.eq.s32.totalorder %v152, %v184
      %vm191 = vmor %vm167, %vm185
      %vm192 = vmor %vm168, %vm186
      %vm193 = vmor %vm169, %vm187
      %vm194 = vmor %vm170, %vm188
      %vm195 = vmor %vm171, %vm189
      %vm196 = vmor %vm172, %vm190
      %vm197 = vcmp.lt.s32.totalorder %v154, 10
      %v198 = vsel %vm197, %v154, 10
      %vm199 = vcmp.lt.s32.totalorder %v156, 10
      %v200 = vsel %vm199, %v156, 10
      %v201 = vadd.s32 %v198, 256
      %v202 = vadd.s32 %v200, 256
      %203 = vset.pattern.permute.xlu0 2
      %204 = vperm.xlu0 %203, %v201
      %v205 = vpop.permute.xlu0 %204
      %206 = vset.pattern.permute.xlu0 2
      %207 = vperm.xlu0 %206, %v202
      %v208 = vpop.permute.xlu0 %207
      %vm209 = vcmp.eq.s32.totalorder %v150, %v205
      %vm210 = vcmp.eq.s32.totalorder %v151, %v205
      %vm211 = vcmp.eq.s32.totalorder %v152, %v205
      %vm212 = vcmp.eq.s32.totalorder %v150, %v208
      %vm213 = vcmp.eq.s32.totalorder %v151, %v208
      %vm214 = vcmp.eq.s32.totalorder %v152, %v208
      %vm215 = vmor %vm191, %vm209
      %vm216 = vmor %vm192, %vm210
      %vm217 = vmor %vm193, %vm211
      %vm218 = vmor %vm194, %vm212
      %vm219 = vmor %vm195, %vm213
      %vm220 = vmor %vm196, %vm214
      %v221 = vsel %vm215, 1, 0
      %v222 = vsel %vm216, 1, 0
      %v223 = vsel %vm217, 1, 0
      %v224 = vsel %vm218, 1, 0
      %v225 = vsel %vm219, 1, 0
      %v226 = vsel %vm220, 1, 0
      %v227 = vcvt.s32.f32 %v221
      %v228 = vcvt.s32.f32 %v222
      %v229 = vcvt.s32.f32 %v223
      %v230 = vcvt.s32.f32 %v224
      %v231 = vcvt.s32.f32 %v225
      %v232 = vcvt.s32.f32 %v226
      %v233 = vld [vmem:[%s1] sm:$0xff]
      %v234 = vld [vmem:[%s1 + $0x8] sm:$0xff]
      %v235 = vld [vmem:[%s1 + $0x10] sm:$0xff]
      %v236 = vld [vmem:[%s1 + $0x18] sm:$0xff]
      %v237 = vld [vmem:[%s1 + $0x20] sm:$0xff]
      %v238 = vld [vmem:[%s1 + $0x28] sm:$0xff]
      %v239 = vld [vmem:[%s1 + $0x30] sm:$0xff]
      %v240 = vld [vmem:[%s1 + $0x38] sm:$0xff]
      %v241 = vld [vmem:[%s1 + $0x40] sm:$0xff]
      %v242 = vld [vmem:[%s1 + $0x48] sm:$0xff]
      %v243 = vld [vmem:[%s1 + $0x50] sm:$0xff]
      %v244 = vld [vmem:[%s1 + $0x58] sm:$0xff]
      %v245 = vld [vmem:[%s1 + $0x60] sm:$0xff]
      %v246 = vld [vmem:[%s1 + $0x68] sm:$0xff]
      %v247 = vld [vmem:[%s1 + $0x70] sm:$0xff]
      %v248 = vld [vmem:[%s1 + $0x78] sm:$0xff]
      %v249 = vld [vmem:[%s1 + $0x80] sm:$0xff]
      %v250 = vld [vmem:[%s1 + $0x88] sm:$0xff]
      %v251 = vld [vmem:[%s1 + $0x90] sm:$0xff]
      %v252 = vld [vmem:[%s1 + $0x98] sm:$0xff]
      %v253 = vld [vmem:[%s1 + $0xa0] sm:$0xff]
      %v254 = vld [vmem:[%s1 + $0xa8] sm:$0xff]
      %v255 = vld [vmem:[%s1 + $0xb0] sm:$0xff]
      %v256 = vld [vmem:[%s1 + $0xb8] sm:$0xff]
      %v257 = vld [vmem:[%s1 + $0xc0] sm:$0xff]
      %v258 = vld [vmem:[%s1 + $0xc8] sm:$0xff]
      %v259 = vld [vmem:[%s1 + $0xd0] sm:$0xff]
      %v260 = vld [vmem:[%s1 + $0xd8] sm:$0xff]
      %v261 = vld [vmem:[%s1 + $0xe0] sm:$0xff]
      %v262 = vld [vmem:[%s1 + $0xe8] sm:$0xff]
      %v263 = vld [vmem:[%s1 + $0xf0] sm:$0xff]
      %v264 = vld [vmem:[%s1 + $0xf8] sm:$0xff]
      %v265 = vld [vmem:[%s1 + $0x100] sm:$0xff]
      %v266 = vld [vmem:[%s1 + $0x108] sm:$0xff]
      %v267 = vld [vmem:[%s1 + $0x110] sm:$0xff]
      %v268 = vld [vmem:[%s1 + $0x118] sm:$0xff]
      %v269 = vld [vmem:[%s1 + $0x120] sm:$0xff]
      %v270 = vld [vmem:[%s1 + $0x128] sm:$0xff]
      %v271 = vld [vmem:[%s1 + $0x130] sm:$0xff]
      %v272 = vld [vmem:[%s1 + $0x138] sm:$0xff]
      %v273 = vld [vmem:[%s1 + $0x140] sm:$0xff]
      %v274 = vld [vmem:[%s1 + $0x148] sm:$0xff]
      %v275 = vld [vmem:[%s1 + $0x150] sm:$0xff]
      %v276 = vld [vmem:[%s1 + $0x158] sm:$0xff]
      %v277 = vld [vmem:[%s1 + $0x160] sm:$0xff]
      %v278 = vld [vmem:[%s1 + $0x168] sm:$0xff]
      %v279 = vld [vmem:[%s1 + $0x170] sm:$0xff]
      %v280 = vld [vmem:[%s1 + $0x178] sm:$0xff]
      %281 = vmatprep.subr.mxu0 0.0
      %282 = vmatpush1.msra.mxu0 %v233
      %283 = vmatprep.subr.mxu0 0.0
      %284 = vmatpush1.msra.mxu0 %v234
      %285 = vmatprep.subr.mxu0 0.0
      %286 = vmatpush1.msra.mxu0 %v235
      %287 = vmatprep.subr.mxu0 0.0
      %288 = vmatpush1.msra.mxu0 %v236
      %289 = vmatprep.subr.mxu0 0.0
      %290 = vmatpush1.msra.mxu0 %v237
      %291 = vmatprep.subr.mxu0 0.0
      %292 = vmatpush1.msra.mxu0 %v238
      %293 = vmatprep.subr.mxu0 0.0
      %294 = vmatpush1.msra.mxu0 %v239
      %295 = vmatprep.subr.mxu0 0.0
      %296 = vmatpush1.msra.mxu0 %v240
      %297 = vmatprep.subr.mxu0 0.0
      %298 = vmatpush1.msra.mxu0 %v241
      %299 = vmatprep.subr.mxu0 0.0
      %300 = vmatpush1.msra.mxu0 %v242
      %301 = vmatprep.subr.mxu0 0.0
      %302 = vmatpush1.msra.mxu0 %v243
      %303 = vmatprep.subr.mxu0 0.0
      %304 = vmatpush1.msra.mxu0 %v244
      %305 = vmatprep.subr.mxu0 0.0
      %306 = vmatpush1.msra.mxu0 %v245
      %307 = vmatprep.subr.mxu0 0.0
      %308 = vmatpush1.msra.mxu0 %v246
      %309 = vmatprep.subr.mxu0 0.0
      %310 = vmatpush1.msra.mxu0 %v247
      %311 = vmatprep.subr.mxu0 0.0
      %312 = vmatpush1.msra.mxu0 %v248
      %313 = vmatprep.subr.mxu0 0.0
      %314 = vmatpush1.msra.mxu0 %v249
      %315 = vmatprep.subr.mxu0 0.0
      %316 = vmatpush1.msra.mxu0 %v250
      %317 = vmatprep.subr.mxu0 0.0
      %318 = vmatpush1.msra.mxu0 %v251
      %319 = vmatprep.subr.mxu0 0.0
      %320 = vmatpush1.msra.mxu0 %v252
      %321 = vmatprep.subr.mxu0 0.0
      %322 = vmatpush1.msra.mxu0 %v253
      %323 = vmatprep.subr.mxu0 0.0
      %324 = vmatpush1.msra.mxu0 %v254
      %325 = vmatprep.subr.mxu0 0.0
      %326 = vmatpush1.msra.mxu0 %v255
      %327 = vmatprep.subr.mxu0 0.0
      %328 = vmatpush1.msra.mxu0 %v256
      %329 = vmatprep.subr.mxu0 0.0
      %330 = vmatpush1.msra.mxu0 %v257
      %331 = vmatprep.subr.mxu0 0.0
      %332 = vmatpush1.msra.mxu0 %v258
      %333 = vmatprep.subr.mxu0 0.0
      %334 = vmatpush1.msra.mxu0 %v259
      %335 = vmatprep.subr.mxu0 0.0
      %336 = vmatpush1.msra.mxu0 %v260
      %337 = vmatprep.subr.mxu0 0.0
      %338 = vmatpush1.msra.mxu0 %v261
      %339 = vmatprep.subr.mxu0 0.0
      %340 = vmatpush1.msra.mxu0 %v262
      %341 = vmatprep.subr.mxu0 0.0
      %342 = vmatpush1.msra.mxu0 %v263
      %343 = vmatprep.subr.mxu0 0.0
      %344 = vmatpush1.msra.mxu0 %v264
      %345 = vmatprep.mubr.f32.mxu0 %v228
      %346 = vmatmul.mubr.f32.gmra.mrb[0].mxu0 %v227
      %v347 = vpop.f32.mrb[0].mxu0
      %v348 = vadd.f32 0.0, %v347
      %v349 = vpop.f32.mrb[0].mxu0
      %350 = vmatprep.mubr.f32.mxu0 %v231
      %351 = vmatmul.mubr.f32.gmra.mrb[0].mxu0 %v230
      %v352 = vpop.f32.mrb[0].mxu0
      %v353 = vadd.f32 0.0, %v352
      %v354 = vpop.f32.mrb[0].mxu0
      %355 = vdwg.mxu0
      %356 = vmatprep.subr.mxu0 0.0
      %357 = vmatpush1.msra.mxu0 %v265
      %358 = vmatprep.subr.mxu0 0.0
      %359 = vmatpush1.msra.mxu0 %v266
      %360 = vmatprep.subr.mxu0 0.0
      %361 = vmatpush1.msra.mxu0 %v267
      %362 = vmatprep.subr.mxu0 0.0
      %363 = vmatpush1.msra.mxu0 %v268
      %364 = vmatprep.subr.mxu0 0.0
      %365 = vmatpush1.msra.mxu0 %v269
      %366 = vmatprep.subr.mxu0 0.0
      %367 = vmatpush1.msra.mxu0 %v270
      %368 = vmatprep.subr.mxu0 0.0
      %369 = vmatpush1.msra.mxu0 %v271
      %370 = vmatprep.subr.mxu0 0.0
      %371 = vmatpush1.msra.mxu0 %v272
      %372 = vmatprep.subr.mxu0 0.0
      %373 = vmatpush1.msra.mxu0 %v273
      %374 = vmatprep.subr.mxu0 0.0
      %375 = vmatpush1.msra.mxu0 %v274
      %376 = vmatprep.subr.mxu0 0.0
      %377 = vmatpush1.msra.mxu0 %v275
      %378 = vmatprep.subr.mxu0 0.0
      %379 = vmatpush1.msra.mxu0 %v276
      %380 = vmatprep.subr.mxu0 0.0
      %381 = vmatpush1.msra.mxu0 %v277
      %382 = vmatprep.subr.mxu0 0.0
      %383 = vmatpush1.msra.mxu0 %v278
      %384 = vmatprep.subr.mxu0 0.0
      %385 = vmatpush1.msra.mxu0 %v279
      %386 = vmatprep.subr.mxu0 0.0
      %387 = vmatpush1.msra.mxu0 %v280
      %388 = vmatprep.subr.mxu0 0.0
      %389 = vmatpush1.msra.mxu0 0.0
      %390 = vmatprep.subr.mxu0 0.0
      %391 = vmatpush1.msra.mxu0 0.0
      %392 = vmatprep.subr.mxu0 0.0
      %393 = vmatpush1.msra.mxu0 0.0
      %394 = vmatprep.subr.mxu0 0.0
      %395 = vmatpush1.msra.mxu0 0.0
      %396 = vmatprep.subr.mxu0 0.0
      %397 = vmatpush1.msra.mxu0 0.0
      %398 = vmatprep.subr.mxu0 0.0
      %399 = vmatpush1.msra.mxu0 0.0
      %400 = vmatprep.subr.mxu0 0.0
      %401 = vmatpush1.msra.mxu0 0.0
      %402 = vmatprep.subr.mxu0 0.0
      %403 = vmatpush1.msra.mxu0 0.0
      %404 = vmatprep.subr.mxu0 0.0
      %405 = vmatpush1.msra.mxu0 0.0
      %406 = vmatprep.subr.mxu0 0.0
      %407 = vmatpush1.msra.mxu0 0.0
      %408 = vmatprep.subr.mxu0 0.0
      %409 = vmatpush1.msra.mxu0 0.0
      %410 = vmatprep.subr.mxu0 0.0
      %411 = vmatpush1.msra.mxu0 0.0
      %412 = vmatprep.subr.mxu0 0.0
      %413 = vmatpush1.msra.mxu0 0.0
      %414 = vmatprep.subr.mxu0 0.0
      %415 = vmatpush1.msra.mxu0 0.0
      %416 = vmatprep.subr.mxu0 0.0
      %417 = vmatpush1.msra.mxu0 0.0
      %418 = vmatprep.subr.mxu0 0.0
      %419 = vmatpush1.msra.mxu0 0.0
      %420 = vmatprep.mubr.f32.mxu0 0.0
      %421 = vmatmul.mubr.f32.gmra.mrb[0].mxu0 %v229
      %v422 = vpop.f32.mrb[0].mxu0
      %v423 = vadd.f32 %v348, %v422
      %v424 = vpop.f32.mrb[0].mxu0
      %425 = vmatprep.mubr.f32.mxu0 0.0
      %426 = vmatmul.mubr.f32.gmra.mrb[0].mxu0 %v232
      %v427 = vpop.f32.mrb[0].mxu0
      %v428 = vadd.f32 %v353, %v427
      %v429 = vpop.f32.mrb[0].mxu0
      %430 = vdwg.mxu0
      %vm431 = vcmask 228352
      %432 = vst.msk [vmem:[%s145] sm:$0xff] %vm431, %v423
      %433 = vst.msk [vmem:[%s145 + $0x8] sm:$0xff] %vm431, %v428
      %s434 = smul.u32 2, %s13
      %p435 = scmp.lt.s32.totalorder %s434, 3
      %s436 = scalar_select %p435, %s434, 3
      %s437 = smul.addr %s436, 8
      %s438 = scalar_lea.vmem %s2, %s437
      // Predicated region
      $region29: #{_fused_cat_embed.1} parent=27 // pred_check
        %p439 = pneg %p78
      $region30: #{_fused_cat_embed.1} parent=27 // pred_check_branch
        %441 = sbr.rel (%p439) target = $region32
      $region31: #{_fused_cat_embed.1} parent=27 // pred_region
        %s442 = smul.u32 2, %s13
      $region32: #{_fused_cat_embed.1} parent=27 // pred_fallthru
        _
    $region28: #{_fused_cat_embed.1} parent=5 // pred_fallthru
      _
    %p443 = scmp.le.s32.totalorder 2, %s8
    // Predicated region
    $region33: #{_fused_cat_embed.1} parent=5 // pred_check
      %p444 = pneg %p443
    $region34: #{_fused_cat_embed.1} parent=5 // pred_check_branch
      %446 = sbr.rel (%p444) target = $region36
    $region35: #{_fused_cat_embed.1} parent=5 // pred_region
      %s447 = ssub.s32 %s8, 2
      // Predicated region
      $region37: #{_fused_cat_embed.1} parent=35 // pred_check
        %p448 = pneg %p84
      $region38: #{_fused_cat_embed.1} parent=35 // pred_check_branch
        %450 = sbr.rel (%p448) target = $region40
      $region39: #{_fused_cat_embed.1} parent=35 // pred_region
        %s451 = smul.u32 2, %s14
        %p452 = scmp.lt.s32.totalorder %s451, 3
        %s453 = scalar_select %p452, %s451, 3
        %s454 = smul.addr %s453, 8
        %s455 = scalar_lea.vmem %s2, %s454
      $region40: #{_fused_cat_embed.1} parent=35 // pred_fallthru
        _
    $region36: #{_fused_cat_embed.1} parent=5 // pred_fallthru
      _
  $region6: #{_fused_cat_embed.1} parent=0 // loop_footer
    %s12 = sadd.s32 1, %s8
  $region7: #{_fused_cat_embed.1} parent=0 // loop_footer_branch
    %7 = sbr.rel target = $region3
  $region8: #{_fused_cat_embed.1} parent=0 // loop_exit
    _

</llo_original>
